<compile_context>
chip_gen: v7x
topology: tpu7x:2x2x1
jax: 0.10.0
libtpu: 0.0.40
codegen_flags: <defaults>
</compile_context>

<pallas_src>
import math

import jax
import jax.numpy as jnp
from jax.experimental import pallas as pl
from jax.experimental.pallas import tpu as pltpu


# ----------------------------------------------------------------------------
# Wavelet generator functions (standard WaveletKernelNet definitions; they are
# referenced but not defined in the provided module source).
# ----------------------------------------------------------------------------
def laplace(p):
    A, ep, tal, f = 0.08, 0.03, 0.1, 50.0
    w = 2.0 * math.pi * f
    q = 1.0 - ep * ep
    return A * jnp.exp((-ep / math.sqrt(q)) * (w * (p - tal))) * (-jnp.sin(w * (p - tal)))


def mexh(p):
    return (1.0 - p * p) * jnp.exp(-(p * p) / 2.0)


def morlet(p):
    C = math.pi ** 0.25
    return C * jnp.exp(-(p * p) / 2.0) * jnp.cos(2.0 * math.pi * p)


def _round_up(x, m):
    return ((x + m - 1) // m) * m


# ----------------------------------------------------------------------------
# Filter construction (mirrors dfw_unit_3.__init__ + forward filter build).
# ----------------------------------------------------------------------------
def build_filters(out_channels, K):
    channels_M = out_channels // 3
    channels_m = out_channels // 3
    channels_L = out_channels - channels_M - channels_m

    time_step_L = jnp.linspace(0.0, 1.0, K)
    time_disc_left = jnp.linspace(-(K / 2) + 1.0, -1.0, K // 2)
    time_disc_right = jnp.linspace(0.0, K / 2 - 1.0, K // 2)
    time_step_Mm = jnp.concatenate([time_disc_left, time_disc_right], axis=0)

    scale_L = jnp.linspace(0.1, 2.0, channels_L)
    scale_M = jnp.linspace(0.1, 3.0, channels_M)
    scale_m = jnp.linspace(0.1, 4.5, channels_m)

    wave_filter_1 = laplace(time_step_L[None, :] / scale_L[:, None])   # (channels_L, K)
    wave_filter_2 = mexh(time_step_Mm[None, :] / scale_M[:, None])     # (channels_M, K)
    wave_filter_3 = morlet(time_step_Mm[None, :] / scale_m[:, None])   # (channels_m, K)

    return jnp.concatenate([wave_filter_1, wave_filter_2, wave_filter_3], axis=0)


# ----------------------------------------------------------------------------
# Pallas conv1d kernel (im2col + MXU matmul), batch-blocked:
#   out[n, c, t] = sum_k w[c, k] * x_pad[n, 0, t + k]
# One grid step handles NB batch rows; the NB im2col panels are packed along
# the lane axis of a single (K_pad, NB*L_out_pad) scratch and the K-tap
# reduction for all NB rows is ONE MXU matmul.
# ----------------------------------------------------------------------------
def make_conv1d(N, NB, C_pad, K, K_pad, L_in_pad, L_out_pad,
                vmem_limit_bytes=32 * 1024 * 1024):
    assert N % NB == 0
    lanes = NB * L_out_pad   # lane width of the im2col scratch / matmul RHS

    def conv1d_kernel(x_ref, w_ref, o_ref, xmat_ref):
        # Zero any K..K_pad padding rows so (garbage * zero-weight) can't NaN.
        # (Re-done every step: scratch is per-core on megacore, so a
        #  program_id(0)==0 guard would be unsafe under "parallel".)
        if K_pad > K:
            xmat_ref[pl.ds(K, K_pad - K), :] = jnp.zeros(
                (K_pad - K, lanes), jnp.float32)

        # Build im2col rows with XLU rolls (no unaligned lane slices): row k of
        # batch-panel b is x[b] shifted left by k, then a lane-aligned
        # [0:L_out_pad) slice, stored at lane offset b*L_out_pad (static,
        # 128-aligned -> unmasked stores).
        for b in range(NB):
            xrow = x_ref[b]                                  # (1, L_in_pad)
            for k in range(K):
                shifted = (xrow if k == 0
                           else pltpu.roll(xrow, shift=L_in_pad - k, axis=1))
                xmat_ref[pl.ds(k, 1), pl.ds(b * L_out_pad, L_out_pad)] = (
                    shifted[:, :L_out_pad])

        # One MXU matmul covers all NB batch rows and all K taps.
        acc = jnp.dot(w_ref[...], xmat_ref[...],
                      preferred_element_type=jnp.float32,
                      precision=jax.lax.Precision.HIGHEST)   # (C_pad, NB*L_out_pad)

        # Full (C_pad, 128*m) lane-dense stores, one per batch row in the block.
        for b in range(NB):
            o_ref[b] = acc[:, b * L_out_pad:(b + 1) * L_out_pad].astype(o_ref.dtype)

    return pl.pallas_call(
        conv1d_kernel,
        out_shape=jax.ShapeDtypeStruct((N, C_pad, L_out_pad), jnp.float32),
        grid_spec=pltpu.PrefetchScalarGridSpec(
            num_scalar_prefetch=0,
            grid=(N // NB,),
            in_specs=[
                pl.BlockSpec((NB, 1, L_in_pad), lambda g: (g, 0, 0)),
                pl.BlockSpec((C_pad, K_pad), lambda g: (0, 0)),   # weights stay resident
            ],
            out_specs=pl.BlockSpec((NB, C_pad, L_out_pad), lambda g: (g, 0, 0)),
            scratch_shapes=[pltpu.VMEM((K_pad, lanes), jnp.float32)],
        ),
        compiler_params=pltpu.CompilerParams(
            dimension_semantics=("parallel",),   # large N shards across v7x's 2 TCs
            vmem_limit_bytes=vmem_limit_bytes,
        ),
    )


def _pick_batch_block(N):
    # Largest of {8,4,2,1} dividing N: fewer grid steps / wider MXU RHS without
    # introducing padded (wasted) batch rows.  For multi-TC chips with small N
    # one could cap this at cdiv(N, 2) to keep >=2 parallel steps; at these
    # shapes the per-step overhead dominates, so prefer the bigger block.
    for cand in (8, 4, 2, 1):
        if N % cand == 0:
            return cand
    return 1


def dfw_unit_3_forward(waveforms, kernel_size_param, out_channels, real_cout,
                       fused_use, softmax_logits):
    # Effective kernel size (same logic as the PyTorch __init__).
    K = kernel_size_param - 1
    if kernel_size_param % 2 == 0:
        K = K + 1

    filters = build_filters(out_channels, K)               # (out_channels, K)

    if fused_use:
        # layeri_softmaxP is a zero buffer in the module (meant to be loaded);
        # initialized here deterministically as a row-softmax so the fuse
        # matmul path is exercised with non-trivial values.
        layeri_softmaxP = jax.nn.softmax(softmax_logits, axis=-1)  # (real_cout, out_channels)
        fused_weight = layeri_softmaxP @ filters                   # (real_cout, K)
    else:
        fused_weight = filters                                     # (out_channels, K)

    C_out = fused_weight.shape[0]
    N, _, L = waveforms.shape

    # F.conv1d(padding=1, stride=1) geometry + TPU-friendly padding.
    L_out = L + 2 - K + 1
    L_out_pad = _round_up(L_out, 128)             # lane-dense output slab
    K_pad = _round_up(K, 8)                       # sublane-aligned im2col / weights
    C_pad = _round_up(C_out, 8)                   # sublane-dense output tile
    L_in_pad = _round_up(L_out_pad + K - 1, 128)  # lane-aligned input, covers all rolls
    NB = _pick_batch_block(N)                     # batch rows per grid step

    # Left conv pad (1 zero) + right padding (includes the 1 conv-pad zero and
    # the lane-alignment zeros). Zero padding keeps rolled regions harmless.
    x_pad = jnp.pad(waveforms.astype(jnp.float32),
                    ((0, 0), (0, 0), (1, L_in_pad - L - 1)))
    w_pad = jnp.pad(fused_weight.astype(jnp.float32),
                    ((0, C_pad - C_out), (0, K_pad - K)))

    conv = make_conv1d(N, NB, C_pad, K, K_pad, L_in_pad, L_out_pad)
    out_padded = conv(x_pad, w_pad)               # (N, C_pad, L_out_pad)
    # Slice away the channel / length padding before downstream use.
    return out_padded[:, :C_out, :L_out], fused_weight


if __name__ == "__main__":
    key = jax.random.PRNGKey(0)
    k_logits, k_x = jax.random.split(key)

    # Small shapes consistent with the module.
    N, L = 2, 128
    kernel_size_param = 16      # -> effective K = 16
    out_channels = 6            # Laplace: 2, Mexhat: 2, Morlet: 2
    real_cout = 4
    fused_use = True

    softmax_logits = jax.random.normal(k_logits, (real_cout, out_channels), jnp.float32)
    waveforms = jax.random.normal(k_x, (N, 1, L), jnp.float32)

    out, fused_weight = dfw_unit_3_forward(
        waveforms, kernel_size_param, out_channels, real_cout, fused_use,
        softmax_logits)
    out = jax.block_until_ready(out)

    K_eff = kernel_size_param - 1 + (1 if kernel_size_param % 2 == 0 else 0)
    L_out = L + 2 - K_eff + 1
    assert out.shape == (N, real_cout, L_out)

    # Reference check against XLA's conv (same cross-correlation semantics as
    # torch.nn.functional.conv1d, padding=1, stride=1).
    ref = jax.lax.conv_general_dilated(
        waveforms, fused_weight[:, None, :], window_strides=(1,),
        padding=[(1, 1)], dimension_numbers=("NCH", "OIH", "NCH"),
        precision=jax.lax.Precision.HIGHEST)
    assert jnp.allclose(out, ref, atol=1e-4, rtol=1e-4), "mismatch vs reference conv"

    print("KERNEL_OK")
</pallas_src>

<mosaic_0001>
module attributes {stable_mosaic.version = 11 : i64} {
  func.func @conv1d_kernel(%arg0: i32, %arg1: memref<2x1x256xf32, #tpu.memory_space<vmem>>, %arg2: memref<8x16xf32, #tpu.memory_space<vmem>>, %arg3: memref<2x8x128xf32, #tpu.memory_space<vmem>>, %arg4: memref<16x256xf32, #tpu.memory_space<vmem>>) attributes {dimension_semantics = [#tpu.dimension_semantics<parallel>], iteration_bounds = array<i64: 1>, scalar_prefetch = 0 : i64, scratch_operands = 1 : i64, tpu.core_type = #tpu.core_type<tc>, window_params = [{transform_indices = @transform_0, window_bounds = array<i64: 2, 1, 256>}, {pipeline_mode = #tpu.pipeline_mode<synchronous>, transform_indices = @transform_1, window_bounds = array<i64: 8, 16>}, {transform_indices = @transform_2, window_bounds = array<i64: 2, 8, 128>}]} {
    %c0 = arith.constant 0 : index
    %c0_0 = arith.constant 0 : index
    %c0_1 = arith.constant 0 : index
    %0 = vector.load %arg1[%c0, %c0_0, %c0_1] : memref<2x1x256xf32, #tpu.memory_space<vmem>>, vector<1x1x256xf32>
    %1 = vector.shape_cast %0 : vector<1x1x256xf32> to vector<1x256xf32>
    %2 = vector.extract_strided_slice %1 {offsets = [0, 0], sizes = [1, 128], strides = [1, 1]} : vector<1x256xf32> to vector<1x128xf32>
    %c0_2 = arith.constant 0 : index
    %c0_3 = arith.constant 0 : index
    %3 = vector.load %arg4[%c0_2, %c0_3] : memref<16x256xf32, #tpu.memory_space<vmem>>, vector<1x128xf32>
    tpu.vector_store %arg4[%c0_2, %c0_3], %2 {strides = array<i32>} : memref<16x256xf32, #tpu.memory_space<vmem>>, vector<1x128xf32>,
    %c255_i32 = arith.constant 255 : i32
    %4 = tpu.dynamic_rotate %1 by %c255_i32 dim 1 : vector<1x256xf32>, i32 -> vector<1x256xf32>
    %5 = vector.extract_strided_slice %4 {offsets = [0, 0], sizes = [1, 128], strides = [1, 1]} : vector<1x256xf32> to vector<1x128xf32>
    %c1 = arith.constant 1 : index
    %c0_4 = arith.constant 0 : index
    %6 = vector.load %arg4[%c1, %c0_4] : memref<16x256xf32, #tpu.memory_space<vmem>>, vector<1x128xf32>
    tpu.vector_store %arg4[%c1, %c0_4], %5 {strides = array<i32>} : memref<16x256xf32, #tpu.memory_space<vmem>>, vector<1x128xf32>,
    %c254_i32 = arith.constant 254 : i32
    %7 = tpu.dynamic_rotate %1 by %c254_i32 dim 1 : vector<1x256xf32>, i32 -> vector<1x256xf32>
    %8 = vector.extract_strided_slice %7 {offsets = [0, 0], sizes = [1, 128], strides = [1, 1]} : vector<1x256xf32> to vector<1x128xf32>
    %c2 = arith.constant 2 : index
    %c0_5 = arith.constant 0 : index
    %9 = vector.load %arg4[%c2, %c0_5] : memref<16x256xf32, #tpu.memory_space<vmem>>, vector<1x128xf32>
    tpu.vector_store %arg4[%c2, %c0_5], %8 {strides = array<i32>} : memref<16x256xf32, #tpu.memory_space<vmem>>, vector<1x128xf32>,
    %c253_i32 = arith.constant 253 : i32
    %10 = tpu.dynamic_rotate %1 by %c253_i32 dim 1 : vector<1x256xf32>, i32 -> vector<1x256xf32>
    %11 = vector.extract_strided_slice %10 {offsets = [0, 0], sizes = [1, 128], strides = [1, 1]} : vector<1x256xf32> to vector<1x128xf32>
    %c3 = arith.constant 3 : index
    %c0_6 = arith.constant 0 : index
    %12 = vector.load %arg4[%c3, %c0_6] : memref<16x256xf32, #tpu.memory_space<vmem>>, vector<1x128xf32>
    tpu.vector_store %arg4[%c3, %c0_6], %11 {strides = array<i32>} : memref<16x256xf32, #tpu.memory_space<vmem>>, vector<1x128xf32>,
    %c252_i32 = arith.constant 252 : i32
    %13 = tpu.dynamic_rotate %1 by %c252_i32 dim 1 : vector<1x256xf32>, i32 -> vector<1x256xf32>
    %14 = vector.extract_strided_slice %13 {offsets = [0, 0], sizes = [1, 128], strides = [1, 1]} : vector<1x256xf32> to vector<1x128xf32>
    %c4 = arith.constant 4 : index
    %c0_7 = arith.constant 0 : index
    %15 = vector.load %arg4[%c4, %c0_7] : memref<16x256xf32, #tpu.memory_space<vmem>>, vector<1x128xf32>
    tpu.vector_store %arg4[%c4, %c0_7], %14 {strides = array<i32>} : memref<16x256xf32, #tpu.memory_space<vmem>>, vector<1x128xf32>,
    %c251_i32 = arith.constant 251 : i32
    %16 = tpu.dynamic_rotate %1 by %c251_i32 dim 1 : vector<1x256xf32>, i32 -> vector<1x256xf32>
    %17 = vector.extract_strided_slice %16 {offsets = [0, 0], sizes = [1, 128], strides = [1, 1]} : vector<1x256xf32> to vector<1x128xf32>
    %c5 = arith.constant 5 : index
    %c0_8 = arith.constant 0 : index
    %18 = vector.load %arg4[%c5, %c0_8] : memref<16x256xf32, #tpu.memory_space<vmem>>, vector<1x128xf32>
    tpu.vector_store %arg4[%c5, %c0_8], %17 {strides = array<i32>} : memref<16x256xf32, #tpu.memory_space<vmem>>, vector<1x128xf32>,
    %c250_i32 = arith.constant 250 : i32
    %19 = tpu.dynamic_rotate %1 by %c250_i32 dim 1 : vector<1x256xf32>, i32 -> vector<1x256xf32>
    %20 = vector.extract_strided_slice %19 {offsets = [0, 0], sizes = [1, 128], strides = [1, 1]} : vector<1x256xf32> to vector<1x128xf32>
    %c6 = arith.constant 6 : index
    %c0_9 = arith.constant 0 : index
    %21 = vector.load %arg4[%c6, %c0_9] : memref<16x256xf32, #tpu.memory_space<vmem>>, vector<1x128xf32>
    tpu.vector_store %arg4[%c6, %c0_9], %20 {strides = array<i32>} : memref<16x256xf32, #tpu.memory_space<vmem>>, vector<1x128xf32>,
    %c249_i32 = arith.constant 249 : i32
    %22 = tpu.dynamic_rotate %1 by %c249_i32 dim 1 : vector<1x256xf32>, i32 -> vector<1x256xf32>
    %23 = vector.extract_strided_slice %22 {offsets = [0, 0], sizes = [1, 128], strides = [1, 1]} : vector<1x256xf32> to vector<1x128xf32>
    %c7 = arith.constant 7 : index
    %c0_10 = arith.constant 0 : index
    %24 = vector.load %arg4[%c7, %c0_10] : memref<16x256xf32, #tpu.memory_space<vmem>>, vector<1x128xf32>
    tpu.vector_store %arg4[%c7, %c0_10], %23 {strides = array<i32>} : memref<16x256xf32, #tpu.memory_space<vmem>>, vector<1x128xf32>,
    %c248_i32 = arith.constant 248 : i32
    %25 = tpu.dynamic_rotate %1 by %c248_i32 dim 1 : vector<1x256xf32>, i32 -> vector<1x256xf32>
    %26 = vector.extract_strided_slice %25 {offsets = [0, 0], sizes = [1, 128], strides = [1, 1]} : vector<1x256xf32> to vector<1x128xf32>
    %c8 = arith.constant 8 : index
    %c0_11 = arith.constant 0 : index
    %27 = vector.load %arg4[%c8, %c0_11] : memref<16x256xf32, #tpu.memory_space<vmem>>, vector<1x128xf32>
    tpu.vector_store %arg4[%c8, %c0_11], %26 {strides = array<i32>} : memref<16x256xf32, #tpu.memory_space<vmem>>, vector<1x128xf32>,
    %c247_i32 = arith.constant 247 : i32
    %28 = tpu.dynamic_rotate %1 by %c247_i32 dim 1 : vector<1x256xf32>, i32 -> vector<1x256xf32>
    %29 = vector.extract_strided_slice %28 {offsets = [0, 0], sizes = [1, 128], strides = [1, 1]} : vector<1x256xf32> to vector<1x128xf32>
    %c9 = arith.constant 9 : index
    %c0_12 = arith.constant 0 : index
    %30 = vector.load %arg4[%c9, %c0_12] : memref<16x256xf32, #tpu.memory_space<vmem>>, vector<1x128xf32>
    tpu.vector_store %arg4[%c9, %c0_12], %29 {strides = array<i32>} : memref<16x256xf32, #tpu.memory_space<vmem>>, vector<1x128xf32>,
    %c246_i32 = arith.constant 246 : i32
    %31 = tpu.dynamic_rotate %1 by %c246_i32 dim 1 : vector<1x256xf32>, i32 -> vector<1x256xf32>
    %32 = vector.extract_strided_slice %31 {offsets = [0, 0], sizes = [1, 128], strides = [1, 1]} : vector<1x256xf32> to vector<1x128xf32>
    %c10 = arith.constant 10 : index
    %c0_13 = arith.constant 0 : index
    %33 = vector.load %arg4[%c10, %c0_13] : memref<16x256xf32, #tpu.memory_space<vmem>>, vector<1x128xf32>
    tpu.vector_store %arg4[%c10, %c0_13], %32 {strides = array<i32>} : memref<16x256xf32, #tpu.memory_space<vmem>>, vector<1x128xf32>,
    %c245_i32 = arith.constant 245 : i32
    %34 = tpu.dynamic_rotate %1 by %c245_i32 dim 1 : vector<1x256xf32>, i32 -> vector<1x256xf32>
    %35 = vector.extract_strided_slice %34 {offsets = [0, 0], sizes = [1, 128], strides = [1, 1]} : vector<1x256xf32> to vector<1x128xf32>
    %c11 = arith.constant 11 : index
    %c0_14 = arith.constant 0 : index
    %36 = vector.load %arg4[%c11, %c0_14] : memref<16x256xf32, #tpu.memory_space<vmem>>, vector<1x128xf32>
    tpu.vector_store %arg4[%c11, %c0_14], %35 {strides = array<i32>} : memref<16x256xf32, #tpu.memory_space<vmem>>, vector<1x128xf32>,
    %c244_i32 = arith.constant 244 : i32
    %37 = tpu.dynamic_rotate %1 by %c244_i32 dim 1 : vector<1x256xf32>, i32 -> vector<1x256xf32>
    %38 = vector.extract_strided_slice %37 {offsets = [0, 0], sizes = [1, 128], strides = [1, 1]} : vector<1x256xf32> to vector<1x128xf32>
    %c12 = arith.constant 12 : index
    %c0_15 = arith.constant 0 : index
    %39 = vector.load %arg4[%c12, %c0_15] : memref<16x256xf32, #tpu.memory_space<vmem>>, vector<1x128xf32>
    tpu.vector_store %arg4[%c12, %c0_15], %38 {strides = array<i32>} : memref<16x256xf32, #tpu.memory_space<vmem>>, vector<1x128xf32>,
    %c243_i32 = arith.constant 243 : i32
    %40 = tpu.dynamic_rotate %1 by %c243_i32 dim 1 : vector<1x256xf32>, i32 -> vector<1x256xf32>
    %41 = vector.extract_strided_slice %40 {offsets = [0, 0], sizes = [1, 128], strides = [1, 1]} : vector<1x256xf32> to vector<1x128xf32>
    %c13 = arith.constant 13 : index
    %c0_16 = arith.constant 0 : index
    %42 = vector.load %arg4[%c13, %c0_16] : memref<16x256xf32, #tpu.memory_space<vmem>>, vector<1x128xf32>
    tpu.vector_store %arg4[%c13, %c0_16], %41 {strides = array<i32>} : memref<16x256xf32, #tpu.memory_space<vmem>>, vector<1x128xf32>,
    %c242_i32 = arith.constant 242 : i32
    %43 = tpu.dynamic_rotate %1 by %c242_i32 dim 1 : vector<1x256xf32>, i32 -> vector<1x256xf32>
    %44 = vector.extract_strided_slice %43 {offsets = [0, 0], sizes = [1, 128], strides = [1, 1]} : vector<1x256xf32> to vector<1x128xf32>
    %c14 = arith.constant 14 : index
    %c0_17 = arith.constant 0 : index
    %45 = vector.load %arg4[%c14, %c0_17] : memref<16x256xf32, #tpu.memory_space<vmem>>, vector<1x128xf32>
    tpu.vector_store %arg4[%c14, %c0_17], %44 {strides = array<i32>} : memref<16x256xf32, #tpu.memory_space<vmem>>, vector<1x128xf32>,
    %c241_i32 = arith.constant 241 : i32
    %46 = tpu.dynamic_rotate %1 by %c241_i32 dim 1 : vector<1x256xf32>, i32 -> vector<1x256xf32>
    %47 = vector.extract_strided_slice %46 {offsets = [0, 0], sizes = [1, 128], strides = [1, 1]} : vector<1x256xf32> to vector<1x128xf32>
    %c15 = arith.constant 15 : index
    %c0_18 = arith.constant 0 : index
    %48 = vector.load %arg4[%c15, %c0_18] : memref<16x256xf32, #tpu.memory_space<vmem>>, vector<1x128xf32>
    tpu.vector_store %arg4[%c15, %c0_18], %47 {strides = array<i32>} : memref<16x256xf32, #tpu.memory_space<vmem>>, vector<1x128xf32>,
    %c1_19 = arith.constant 1 : index
    %c0_20 = arith.constant 0 : index
    %c0_21 = arith.constant 0 : index
    %49 = vector.load %arg1[%c1_19, %c0_20, %c0_21] : memref<2x1x256xf32, #tpu.memory_space<vmem>>, vector<1x1x256xf32>
    %50 = vector.shape_cast %49 : vector<1x1x256xf32> to vector<1x256xf32>
    %51 = vector.extract_strided_slice %50 {offsets = [0, 0], sizes = [1, 128], strides = [1, 1]} : vector<1x256xf32> to vector<1x128xf32>
    %c0_22 = arith.constant 0 : index
    %c128 = arith.constant 128 : index
    %52 = vector.load %arg4[%c0_22, %c128] : memref<16x256xf32, #tpu.memory_space<vmem>>, vector<1x128xf32>
    tpu.vector_store %arg4[%c0_22, %c128], %51 {strides = array<i32>} : memref<16x256xf32, #tpu.memory_space<vmem>>, vector<1x128xf32>,
    %c255_i32_23 = arith.constant 255 : i32
    %53 = tpu.dynamic_rotate %50 by %c255_i32_23 dim 1 : vector<1x256xf32>, i32 -> vector<1x256xf32>
    %54 = vector.extract_strided_slice %53 {offsets = [0, 0], sizes = [1, 128], strides = [1, 1]} : vector<1x256xf32> to vector<1x128xf32>
    %c1_24 = arith.constant 1 : index
    %c128_25 = arith.constant 128 : index
    %55 = vector.load %arg4[%c1_24, %c128_25] : memref<16x256xf32, #tpu.memory_space<vmem>>, vector<1x128xf32>
    tpu.vector_store %arg4[%c1_24, %c128_25], %54 {strides = array<i32>} : memref<16x256xf32, #tpu.memory_space<vmem>>, vector<1x128xf32>,
    %c254_i32_26 = arith.constant 254 : i32
    %56 = tpu.dynamic_rotate %50 by %c254_i32_26 dim 1 : vector<1x256xf32>, i32 -> vector<1x256xf32>
    %57 = vector.extract_strided_slice %56 {offsets = [0, 0], sizes = [1, 128], strides = [1, 1]} : vector<1x256xf32> to vector<1x128xf32>
    %c2_27 = arith.constant 2 : index
    %c128_28 = arith.constant 128 : index
    %58 = vector.load %arg4[%c2_27, %c128_28] : memref<16x256xf32, #tpu.memory_space<vmem>>, vector<1x128xf32>
    tpu.vector_store %arg4[%c2_27, %c128_28], %57 {strides = array<i32>} : memref<16x256xf32, #tpu.memory_space<vmem>>, vector<1x128xf32>,
    %c253_i32_29 = arith.constant 253 : i32
    %59 = tpu.dynamic_rotate %50 by %c253_i32_29 dim 1 : vector<1x256xf32>, i32 -> vector<1x256xf32>
    %60 = vector.extract_strided_slice %59 {offsets = [0, 0], sizes = [1, 128], strides = [1, 1]} : vector<1x256xf32> to vector<1x128xf32>
    %c3_30 = arith.constant 3 : index
    %c128_31 = arith.constant 128 : index
    %61 = vector.load %arg4[%c3_30, %c128_31] : memref<16x256xf32, #tpu.memory_space<vmem>>, vector<1x128xf32>
    tpu.vector_store %arg4[%c3_30, %c128_31], %60 {strides = array<i32>} : memref<16x256xf32, #tpu.memory_space<vmem>>, vector<1x128xf32>,
    %c252_i32_32 = arith.constant 252 : i32
    %62 = tpu.dynamic_rotate %50 by %c252_i32_32 dim 1 : vector<1x256xf32>, i32 -> vector<1x256xf32>
    %63 = vector.extract_strided_slice %62 {offsets = [0, 0], sizes = [1, 128], strides = [1, 1]} : vector<1x256xf32> to vector<1x128xf32>
    %c4_33 = arith.constant 4 : index
    %c128_34 = arith.constant 128 : index
    %64 = vector.load %arg4[%c4_33, %c128_34] : memref<16x256xf32, #tpu.memory_space<vmem>>, vector<1x128xf32>
    tpu.vector_store %arg4[%c4_33, %c128_34], %63 {strides = array<i32>} : memref<16x256xf32, #tpu.memory_space<vmem>>, vector<1x128xf32>,
    %c251_i32_35 = arith.constant 251 : i32
    %65 = tpu.dynamic_rotate %50 by %c251_i32_35 dim 1 : vector<1x256xf32>, i32 -> vector<1x256xf32>
    %66 = vector.extract_strided_slice %65 {offsets = [0, 0], sizes = [1, 128], strides = [1, 1]} : vector<1x256xf32> to vector<1x128xf32>
    %c5_36 = arith.constant 5 : index
    %c128_37 = arith.constant 128 : index
    %67 = vector.load %arg4[%c5_36, %c128_37] : memref<16x256xf32, #tpu.memory_space<vmem>>, vector<1x128xf32>
    tpu.vector_store %arg4[%c5_36, %c128_37], %66 {strides = array<i32>} : memref<16x256xf32, #tpu.memory_space<vmem>>, vector<1x128xf32>,
    %c250_i32_38 = arith.constant 250 : i32
    %68 = tpu.dynamic_rotate %50 by %c250_i32_38 dim 1 : vector<1x256xf32>, i32 -> vector<1x256xf32>
    %69 = vector.extract_strided_slice %68 {offsets = [0, 0], sizes = [1, 128], strides = [1, 1]} : vector<1x256xf32> to vector<1x128xf32>
    %c6_39 = arith.constant 6 : index
    %c128_40 = arith.constant 128 : index
    %70 = vector.load %arg4[%c6_39, %c128_40] : memref<16x256xf32, #tpu.memory_space<vmem>>, vector<1x128xf32>
    tpu.vector_store %arg4[%c6_39, %c128_40], %69 {strides = array<i32>} : memref<16x256xf32, #tpu.memory_space<vmem>>, vector<1x128xf32>,
    %c249_i32_41 = arith.constant 249 : i32
    %71 = tpu.dynamic_rotate %50 by %c249_i32_41 dim 1 : vector<1x256xf32>, i32 -> vector<1x256xf32>
    %72 = vector.extract_strided_slice %71 {offsets = [0, 0], sizes = [1, 128], strides = [1, 1]} : vector<1x256xf32> to vector<1x128xf32>
    %c7_42 = arith.constant 7 : index
    %c128_43 = arith.constant 128 : index
    %73 = vector.load %arg4[%c7_42, %c128_43] : memref<16x256xf32, #tpu.memory_space<vmem>>, vector<1x128xf32>
    tpu.vector_store %arg4[%c7_42, %c128_43], %72 {strides = array<i32>} : memref<16x256xf32, #tpu.memory_space<vmem>>, vector<1x128xf32>,
    %c248_i32_44 = arith.constant 248 : i32
    %74 = tpu.dynamic_rotate %50 by %c248_i32_44 dim 1 : vector<1x256xf32>, i32 -> vector<1x256xf32>
    %75 = vector.extract_strided_slice %74 {offsets = [0, 0], sizes = [1, 128], strides = [1, 1]} : vector<1x256xf32> to vector<1x128xf32>
    %c8_45 = arith.constant 8 : index
    %c128_46 = arith.constant 128 : index
    %76 = vector.load %arg4[%c8_45, %c128_46] : memref<16x256xf32, #tpu.memory_space<vmem>>, vector<1x128xf32>
    tpu.vector_store %arg4[%c8_45, %c128_46], %75 {strides = array<i32>} : memref<16x256xf32, #tpu.memory_space<vmem>>, vector<1x128xf32>,
    %c247_i32_47 = arith.constant 247 : i32
    %77 = tpu.dynamic_rotate %50 by %c247_i32_47 dim 1 : vector<1x256xf32>, i32 -> vector<1x256xf32>
    %78 = vector.extract_strided_slice %77 {offsets = [0, 0], sizes = [1, 128], strides = [1, 1]} : vector<1x256xf32> to vector<1x128xf32>
    %c9_48 = arith.constant 9 : index
    %c128_49 = arith.constant 128 : index
    %79 = vector.load %arg4[%c9_48, %c128_49] : memref<16x256xf32, #tpu.memory_space<vmem>>, vector<1x128xf32>
    tpu.vector_store %arg4[%c9_48, %c128_49], %78 {strides = array<i32>} : memref<16x256xf32, #tpu.memory_space<vmem>>, vector<1x128xf32>,
    %c246_i32_50 = arith.constant 246 : i32
    %80 = tpu.dynamic_rotate %50 by %c246_i32_50 dim 1 : vector<1x256xf32>, i32 -> vector<1x256xf32>
    %81 = vector.extract_strided_slice %80 {offsets = [0, 0], sizes = [1, 128], strides = [1, 1]} : vector<1x256xf32> to vector<1x128xf32>
    %c10_51 = arith.constant 10 : index
    %c128_52 = arith.constant 128 : index
    %82 = vector.load %arg4[%c10_51, %c128_52] : memref<16x256xf32, #tpu.memory_space<vmem>>, vector<1x128xf32>
    tpu.vector_store %arg4[%c10_51, %c128_52], %81 {strides = array<i32>} : memref<16x256xf32, #tpu.memory_space<vmem>>, vector<1x128xf32>,
    %c245_i32_53 = arith.constant 245 : i32
    %83 = tpu.dynamic_rotate %50 by %c245_i32_53 dim 1 : vector<1x256xf32>, i32 -> vector<1x256xf32>
    %84 = vector.extract_strided_slice %83 {offsets = [0, 0], sizes = [1, 128], strides = [1, 1]} : vector<1x256xf32> to vector<1x128xf32>
    %c11_54 = arith.constant 11 : index
    %c128_55 = arith.constant 128 : index
    %85 = vector.load %arg4[%c11_54, %c128_55] : memref<16x256xf32, #tpu.memory_space<vmem>>, vector<1x128xf32>
    tpu.vector_store %arg4[%c11_54, %c128_55], %84 {strides = array<i32>} : memref<16x256xf32, #tpu.memory_space<vmem>>, vector<1x128xf32>,
    %c244_i32_56 = arith.constant 244 : i32
    %86 = tpu.dynamic_rotate %50 by %c244_i32_56 dim 1 : vector<1x256xf32>, i32 -> vector<1x256xf32>
    %87 = vector.extract_strided_slice %86 {offsets = [0, 0], sizes = [1, 128], strides = [1, 1]} : vector<1x256xf32> to vector<1x128xf32>
    %c12_57 = arith.constant 12 : index
    %c128_58 = arith.constant 128 : index
    %88 = vector.load %arg4[%c12_57, %c128_58] : memref<16x256xf32, #tpu.memory_space<vmem>>, vector<1x128xf32>
    tpu.vector_store %arg4[%c12_57, %c128_58], %87 {strides = array<i32>} : memref<16x256xf32, #tpu.memory_space<vmem>>, vector<1x128xf32>,
    %c243_i32_59 = arith.constant 243 : i32
    %89 = tpu.dynamic_rotate %50 by %c243_i32_59 dim 1 : vector<1x256xf32>, i32 -> vector<1x256xf32>
    %90 = vector.extract_strided_slice %89 {offsets = [0, 0], sizes = [1, 128], strides = [1, 1]} : vector<1x256xf32> to vector<1x128xf32>
    %c13_60 = arith.constant 13 : index
    %c128_61 = arith.constant 128 : index
    %91 = vector.load %arg4[%c13_60, %c128_61] : memref<16x256xf32, #tpu.memory_space<vmem>>, vector<1x128xf32>
    tpu.vector_store %arg4[%c13_60, %c128_61], %90 {strides = array<i32>} : memref<16x256xf32, #tpu.memory_space<vmem>>, vector<1x128xf32>,
    %c242_i32_62 = arith.constant 242 : i32
    %92 = tpu.dynamic_rotate %50 by %c242_i32_62 dim 1 : vector<1x256xf32>, i32 -> vector<1x256xf32>
    %93 = vector.extract_strided_slice %92 {offsets = [0, 0], sizes = [1, 128], strides = [1, 1]} : vector<1x256xf32> to vector<1x128xf32>
    %c14_63 = arith.constant 14 : index
    %c128_64 = arith.constant 128 : index
    %94 = vector.load %arg4[%c14_63, %c128_64] : memref<16x256xf32, #tpu.memory_space<vmem>>, vector<1x128xf32>
    tpu.vector_store %arg4[%c14_63, %c128_64], %93 {strides = array<i32>} : memref<16x256xf32, #tpu.memory_space<vmem>>, vector<1x128xf32>,
    %c241_i32_65 = arith.constant 241 : i32
    %95 = tpu.dynamic_rotate %50 by %c241_i32_65 dim 1 : vector<1x256xf32>, i32 -> vector<1x256xf32>
    %96 = vector.extract_strided_slice %95 {offsets = [0, 0], sizes = [1, 128], strides = [1, 1]} : vector<1x256xf32> to vector<1x128xf32>
    %c15_66 = arith.constant 15 : index
    %c128_67 = arith.constant 128 : index
    %97 = vector.load %arg4[%c15_66, %c128_67] : memref<16x256xf32, #tpu.memory_space<vmem>>, vector<1x128xf32>
    tpu.vector_store %arg4[%c15_66, %c128_67], %96 {strides = array<i32>} : memref<16x256xf32, #tpu.memory_space<vmem>>, vector<1x128xf32>,
    %c0_68 = arith.constant 0 : index
    %c0_69 = arith.constant 0 : index
    %98 = vector.load %arg2[%c0_68, %c0_69] : memref<8x16xf32, #tpu.memory_space<vmem>>, vector<8x16xf32>
    %c0_70 = arith.constant 0 : index
    %c0_71 = arith.constant 0 : index
    %99 = vector.load %arg4[%c0_70, %c0_71] : memref<16x256xf32, #tpu.memory_space<vmem>>, vector<16x256xf32>
    %cst = arith.constant dense<0.000000e+00> : vector<8x256xf32>
    %100 = tpu.matmul %98, %99, %cst {dimension_numbers = #tpu.dot_dimension_numbers<[1], [0], [0], [1], [0, 0, 1, 1], [], []>, precision = #tpu.contract_precision<fp32>} : vector<8x16xf32>, vector<16x256xf32>, vector<8x256xf32> -> vector<8x256xf32>
    %101 = vector.extract_strided_slice %100 {offsets = [0, 0], sizes = [8, 128], strides = [1, 1]} : vector<8x256xf32> to vector<8x128xf32>
    %c0_72 = arith.constant 0 : index
    %c0_73 = arith.constant 0 : index
    %c0_74 = arith.constant 0 : index
    %102 = vector.load %arg3[%c0_72, %c0_73, %c0_74] : memref<2x8x128xf32, #tpu.memory_space<vmem>>, vector<1x8x128xf32>
    %103 = vector.shape_cast %102 : vector<1x8x128xf32> to vector<8x128xf32>
    %104 = vector.shape_cast %101 : vector<8x128xf32> to vector<1x8x128xf32>
    tpu.vector_store %arg3[%c0_72, %c0_73, %c0_74], %104 {strides = array<i32>} : memref<2x8x128xf32, #tpu.memory_space<vmem>>, vector<1x8x128xf32>,
    %105 = vector.extract_strided_slice %100 {offsets = [0, 128], sizes = [8, 128], strides = [1, 1]} : vector<8x256xf32> to vector<8x128xf32>
    %c1_75 = arith.constant 1 : index
    %c0_76 = arith.constant 0 : index
    %c0_77 = arith.constant 0 : index
    %106 = vector.load %arg3[%c1_75, %c0_76, %c0_77] : memref<2x8x128xf32, #tpu.memory_space<vmem>>, vector<1x8x128xf32>
    %107 = vector.shape_cast %106 : vector<1x8x128xf32> to vector<8x128xf32>
    %108 = vector.shape_cast %105 : vector<8x128xf32> to vector<1x8x128xf32>
    tpu.vector_store %arg3[%c1_75, %c0_76, %c0_77], %108 {strides = array<i32>} : memref<2x8x128xf32, #tpu.memory_space<vmem>>, vector<1x8x128xf32>,
    return
  }
  func.func @transform_0(%arg0: i32) -> (i32, i32, i32) {
    %c0_i32 = arith.constant 0 : i32
    %c0_i32_0 = arith.constant 0 : i32
    %c0_i32_1 = arith.constant 0 : i32
    return %arg0, %c0_i32, %c0_i32_0 : i32, i32, i32
  }
  func.func @transform_1(%arg0: i32) -> (i32, i32) {
    %c0_i32 = arith.constant 0 : i32
    %c0_i32_0 = arith.constant 0 : i32
    %c0_i32_1 = arith.constant 0 : i32
    return %c0_i32, %c0_i32_0 : i32, i32
  }
  func.func @transform_2(%arg0: i32) -> (i32, i32, i32) {
    %c0_i32 = arith.constant 0 : i32
    %c0_i32_0 = arith.constant 0 : i32
    %c0_i32_1 = arith.constant 0 : i32
    return %arg0, %c0_i32, %c0_i32_0 : i32, i32, i32
  }
}

</mosaic_0001>

<llo_original>
// kernel: tpu_custom_call.1
$region0: #{tpu_custom_call.1}
  #allocation0 [shape = 'u32[]', space=smem, size = 0x4, offset = 0x4, fixed_abs, tag = 'smem constant byte address 0x4 - core index']
  #allocation1 [shape = 'u32[144,128]{1,0:T(1,128)}', space=vmem, size = 0x12000, scoped, tag = 'internal scratch']
  #allocation2 [shape = 'f32[16,256]{1,0:T(8,128)}', space=vmem, size = 0x4000, scoped, tag = 'scratch operand']
  %s0 = inlined_call_operand.hbm [shape: f32[2,1,256], index: 0, kind: input, shape index: {}]
  %s1 = inlined_call_operand.hbm [shape: f32[8,16], index: 1, kind: input, shape index: {}]
  %s2 = inlined_call_operand.hbm [shape: f32[2,8,128], index: 2, kind: output, shape index: {}]
  %s3 = sld [smem:[#allocation0]]
  $region26: #{tpu_custom_call.1} parent=0
    _
  %s5 = ssub.s32 1, %s3
  %s6 = scalar_select 0, %s5, %s3
  $region1: #{tpu_custom_call.1} parent=0
    #allocation3 [shape = 'u8[2048]{0}', space=vmem, size = 0x800, scoped, tag = 'input window, operand 0, single buffered']
    #allocation4 [shape = 's32[1]{0}', space=sflag, size = 0x4, scoped, tag = 'scoped memory for tpu_custom_call.1']
    #allocation5 [shape = 's32[1]{0}', space=sflag, size = 0x4, scoped, tag = 'scoped memory for tpu_custom_call.1']
    #allocation6 [shape = 'u8[4096]{0}', space=vmem, size = 0x1000, scoped, tag = 'input window, operand 1, single buffered']
    #allocation7 [shape = 's32[1]{0}', space=sflag, size = 0x4, scoped, tag = 'scoped memory for tpu_custom_call.1']
    #allocation8 [shape = 'u8[8192]{0}', space=vmem, size = 0x2000, scoped, tag = 'output window, operand 0, single buffered']
    %7 = vsyncpa [#allocation4], 0
    %8 = vsyncpa [#allocation7], 0
    %9 = vsyncpa [#allocation5], 0
    // Predicated region
    $region2: #{tpu_custom_call.1} parent=1 // pred_check
      _
    $region3: #{tpu_custom_call.1} parent=1 // pred_check_branch
      %11 = sbr.rel (0) target = $region5
    $region4: #{tpu_custom_call.1} parent=1 // pred_region
      %s13 = ssub.s32 64, 64
      %14 = vsyncadd [#allocation4], %s13
      %s15 = sshll.u32 [#allocation3], 4
      %s16 = int_to_ptr.vmem [resolvable:$true] %s15
      %21 = dma.hbm_to_vmem [thread:$0]  %s0, 64, %s16, [#allocation4], 32, 32, 2
    $region5: #{tpu_custom_call.1} parent=1 // pred_fallthru
      _
    // Predicated region
    $region6: #{tpu_custom_call.1} parent=1 // pred_check
      _
    $region7: #{tpu_custom_call.1} parent=1 // pred_check_branch
      %23 = sbr.rel (0) target = $region9
    $region8: #{tpu_custom_call.1} parent=1 // pred_region
      %s25 = ssub.s32 128, 128
      %26 = vsyncadd [#allocation7], %s25
      %s28 = sshll.u32 [#allocation6], 4
      %s29 = int_to_ptr.vmem [resolvable:$true] %s28
      %31 = dma.hbm_to_vmem [thread:$0]  %s1, 128, %s29, [#allocation7]
    $region9: #{tpu_custom_call.1} parent=1 // pred_fallthru
      _
    // Predicated region
    $region10: #{tpu_custom_call.1} parent=1 // pred_check
      _
    $region11: #{tpu_custom_call.1} parent=1 // pred_check_branch
      %33 = sbr.rel (0) target = $region13
    $region12: #{tpu_custom_call.1} parent=1 // pred_region
      %34 = dma.done [#allocation4], 64
    $region13: #{tpu_custom_call.1} parent=1 // pred_fallthru
      _
    // Predicated region
    $region14: #{tpu_custom_call.1} parent=1 // pred_check
      _
    $region15: #{tpu_custom_call.1} parent=1 // pred_check_branch
      %36 = sbr.rel (0) target = $region17
    $region16: #{tpu_custom_call.1} parent=1 // pred_region
      %37 = dma.done [#allocation7], 128
    $region17: #{tpu_custom_call.1} parent=1 // pred_fallthru
      _
    %v38 = vld [vmem:[#allocation3] sm:$0x3]
    %39 = vst [vmem:[#allocation2] sm:$0x1] %v38
    %v41 = vlaneseq
    %v42 = vshrl.u32 %v41, 7
    %v43 = vsub.s32 0, %v42
    %v44 = vrot.slane %v38, %v43
    %v45 = vlaneseq
    %v46 = vshrl.u32 %v45, 7
    %v47 = vsub.s32 1, %v46
    %v48 = vrot.slane %v38, %v47
    %51 = vrot.lane.b32.xlu0 %v44, 127
    %v52 = vpop.permute.xlu0 %51
    %53 = vrot.lane.b32.xlu0 %v48, 127
    %v54 = vpop.permute.xlu0 %53
    %v55 = vlaneseq
    %v56 = vand.u32 %v55, 127
    %vm57 = vcmp.lt.s32.totalorder %v56, 127
    %v58 = vsel %vm57, %v52, %v54
    %59 = vst [vmem:[#allocation2 + $0x1] sm:$0x1] %v58
    %60 = vrot.lane.b32.xlu0 %v44, 126
    %v61 = vpop.permute.xlu0 %60
    %62 = vrot.lane.b32.xlu0 %v48, 126
    %v63 = vpop.permute.xlu0 %62
    %vm64 = vcmp.lt.s32.totalorder %v56, 126
    %v65 = vsel %vm64, %v61, %v63
    %66 = vst [vmem:[#allocation2 + $0x2] sm:$0x1] %v65
    %67 = vrot.lane.b32.xlu0 %v44, 125
    %v68 = vpop.permute.xlu0 %67
    %69 = vrot.lane.b32.xlu0 %v48, 125
    %v70 = vpop.permute.xlu0 %69
    %vm71 = vcmp.lt.s32.totalorder %v56, 125
    %v72 = vsel %vm71, %v68, %v70
    %73 = vst [vmem:[#allocation2 + $0x3] sm:$0x1] %v72
    %74 = vrot.lane.b32.xlu0 %v44, 124
    %v75 = vpop.permute.xlu0 %74
    %76 = vrot.lane.b32.xlu0 %v48, 124
    %v77 = vpop.permute.xlu0 %76
    %vm78 = vcmp.lt.s32.totalorder %v56, 124
    %v79 = vsel %vm78, %v75, %v77
    %80 = vst [vmem:[#allocation2 + $0x4] sm:$0x1] %v79
    %81 = vrot.lane.b32.xlu0 %v44, 123
    %v82 = vpop.permute.xlu0 %81
    %83 = vrot.lane.b32.xlu0 %v48, 123
    %v84 = vpop.permute.xlu0 %83
    %vm85 = vcmp.lt.s32.totalorder %v56, 123
    %v86 = vsel %vm85, %v82, %v84
    %87 = vst [vmem:[#allocation2 + $0x5] sm:$0x1] %v86
    %88 = vrot.lane.b32.xlu0 %v44, 122
    %v89 = vpop.permute.xlu0 %88
    %90 = vrot.lane.b32.xlu0 %v48, 122
    %v91 = vpop.permute.xlu0 %90
    %vm92 = vcmp.lt.s32.totalorder %v56, 122
    %v93 = vsel %vm92, %v89, %v91
    %94 = vst [vmem:[#allocation2 + $0x6] sm:$0x1] %v93
    %95 = vrot.lane.b32.xlu0 %v44, 121
    %v96 = vpop.permute.xlu0 %95
    %97 = vrot.lane.b32.xlu0 %v48, 121
    %v98 = vpop.permute.xlu0 %97
    %vm99 = vcmp.lt.s32.totalorder %v56, 121
    %v100 = vsel %vm99, %v96, %v98
    %101 = vst [vmem:[#allocation2 + $0x7] sm:$0x1] %v100
    %102 = vrot.lane.b32.xlu0 %v44, 120
    %v103 = vpop.permute.xlu0 %102
    %104 = vrot.lane.b32.xlu0 %v48, 120
    %v105 = vpop.permute.xlu0 %104
    %vm106 = vcmp.lt.s32.totalorder %v56, 120
    %v107 = vsel %vm106, %v103, %v105
    %108 = vst [vmem:[#allocation2 + $0x10] sm:$0x1] %v107
    %109 = vrot.lane.b32.xlu0 %v44, 119
    %v110 = vpop.permute.xlu0 %109
    %111 = vrot.lane.b32.xlu0 %v48, 119
    %v112 = vpop.permute.xlu0 %111
    %vm113 = vcmp.lt.s32.totalorder %v56, 119
    %v114 = vsel %vm113, %v110, %v112
    %115 = vst [vmem:[#allocation2 + $0x11] sm:$0x1] %v114
    %116 = vrot.lane.b32.xlu0 %v44, 118
    %v117 = vpop.permute.xlu0 %116
    %118 = vrot.lane.b32.xlu0 %v48, 118
    %v119 = vpop.permute.xlu0 %118
    %vm120 = vcmp.lt.s32.totalorder %v56, 118
    %v121 = vsel %vm120, %v117, %v119
    %122 = vst [vmem:[#allocation2 + $0x12] sm:$0x1] %v121
    %123 = vrot.lane.b32.xlu0 %v44, 117
    %v124 = vpop.permute.xlu0 %123
    %125 = vrot.lane.b32.xlu0 %v48, 117
    %v126 = vpop.permute.xlu0 %125
    %vm127 = vcmp.lt.s32.totalorder %v56, 117
    %v128 = vsel %vm127, %v124, %v126
    %129 = vst [vmem:[#allocation2 + $0x13] sm:$0x1] %v128
    %130 = vrot.lane.b32.xlu0 %v44, 116
    %v131 = vpop.permute.xlu0 %130
    %132 = vrot.lane.b32.xlu0 %v48, 116
    %v133 = vpop.permute.xlu0 %132
    %vm134 = vcmp.lt.s32.totalorder %v56, 116
    %v135 = vsel %vm134, %v131, %v133
    %136 = vst [vmem:[#allocation2 + $0x14] sm:$0x1] %v135
    %137 = vrot.lane.b32.xlu0 %v44, 115
    %v138 = vpop.permute.xlu0 %137
    %139 = vrot.lane.b32.xlu0 %v48, 115
    %v140 = vpop.permute.xlu0 %139
    %vm141 = vcmp.lt.s32.totalorder %v56, 115
    %v142 = vsel %vm141, %v138, %v140
    %143 = vst [vmem:[#allocation2 + $0x15] sm:$0x1] %v142
    %144 = vrot.lane.b32.xlu0 %v44, 114
    %v145 = vpop.permute.xlu0 %144
    %146 = vrot.lane.b32.xlu0 %v48, 114
    %v147 = vpop.permute.xlu0 %146
    %vm148 = vcmp.lt.s32.totalorder %v56, 114
    %v149 = vsel %vm148, %v145, %v147
    %150 = vst [vmem:[#allocation2 + $0x16] sm:$0x1] %v149
    %151 = vrot.lane.b32.xlu0 %v44, 113
    %v152 = vpop.permute.xlu0 %151
    %153 = vrot.lane.b32.xlu0 %v48, 113
    %v154 = vpop.permute.xlu0 %153
    %vm155 = vcmp.lt.s32.totalorder %v56, 113
    %v156 = vsel %vm155, %v152, %v154
    %157 = vst [vmem:[#allocation2 + $0x17] sm:$0x1] %v156
    %s158 = scalar_lea.vmem [#allocation3], 2
    %v159 = vld [vmem:[%s158] sm:$0x3]
    %160 = vst [vmem:[#allocation2 + $0x8] sm:$0x1] %v159
    %v162 = vlaneseq
    %v163 = vshrl.u32 %v162, 7
    %v164 = vsub.s32 0, %v163
    %v165 = vrot.slane %v159, %v164
    %v166 = vlaneseq
    %v167 = vshrl.u32 %v166, 7
    %v168 = vsub.s32 1, %v167
    %v169 = vrot.slane %v159, %v168
    %172 = vrot.lane.b32.xlu0 %v165, 127
    %v173 = vpop.permute.xlu0 %172
    %174 = vrot.lane.b32.xlu0 %v169, 127
    %v175 = vpop.permute.xlu0 %174
    %v176 = vsel %vm57, %v173, %v175
    %177 = vst [vmem:[#allocation2 + $0x9] sm:$0x1] %v176
    %178 = vrot.lane.b32.xlu0 %v165, 126
    %v179 = vpop.permute.xlu0 %178
    %180 = vrot.lane.b32.xlu0 %v169, 126
    %v181 = vpop.permute.xlu0 %180
    %v182 = vsel %vm64, %v179, %v181
    %183 = vst [vmem:[#allocation2 + $0xa] sm:$0x1] %v182
    %184 = vrot.lane.b32.xlu0 %v165, 125
    %v185 = vpop.permute.xlu0 %184
    %186 = vrot.lane.b32.xlu0 %v169, 125
    %v187 = vpop.permute.xlu0 %186
    %v188 = vsel %vm71, %v185, %v187
    %189 = vst [vmem:[#allocation2 + $0xb] sm:$0x1] %v188
    %190 = vrot.lane.b32.xlu0 %v165, 124
    %v191 = vpop.permute.xlu0 %190
    %192 = vrot.lane.b32.xlu0 %v169, 124
    %v193 = vpop.permute.xlu0 %192
    %v194 = vsel %vm78, %v191, %v193
    %195 = vst [vmem:[#allocation2 + $0xc] sm:$0x1] %v194
    %196 = vrot.lane.b32.xlu0 %v165, 123
    %v197 = vpop.permute.xlu0 %196
    %198 = vrot.lane.b32.xlu0 %v169, 123
    %v199 = vpop.permute.xlu0 %198
    %v200 = vsel %vm85, %v197, %v199
    %201 = vst [vmem:[#allocation2 + $0xd] sm:$0x1] %v200
    %202 = vrot.lane.b32.xlu0 %v165, 122
    %v203 = vpop.permute.xlu0 %202
    %204 = vrot.lane.b32.xlu0 %v169, 122
    %v205 = vpop.permute.xlu0 %204
    %v206 = vsel %vm92, %v203, %v205
    %207 = vst [vmem:[#allocation2 + $0xe] sm:$0x1] %v206
    %208 = vrot.lane.b32.xlu0 %v165, 121
    %v209 = vpop.permute.xlu0 %208
    %210 = vrot.lane.b32.xlu0 %v169, 121
    %v211 = vpop.permute.xlu0 %210
    %v212 = vsel %vm99, %v209, %v211
    %213 = vst [vmem:[#allocation2 + $0xf] sm:$0x1] %v212
    %214 = vrot.lane.b32.xlu0 %v165, 120
    %v215 = vpop.permute.xlu0 %214
    %216 = vrot.lane.b32.xlu0 %v169, 120
    %v217 = vpop.permute.xlu0 %216
    %v218 = vsel %vm106, %v215, %v217
    %219 = vst [vmem:[#allocation2 + $0x18] sm:$0x1] %v218
    %220 = vrot.lane.b32.xlu0 %v165, 119
    %v221 = vpop.permute.xlu0 %220
    %222 = vrot.lane.b32.xlu0 %v169, 119
    %v223 = vpop.permute.xlu0 %222
    %v224 = vsel %vm113, %v221, %v223
    %225 = vst [vmem:[#allocation2 + $0x19] sm:$0x1] %v224
    %226 = vrot.lane.b32.xlu0 %v165, 118
    %v227 = vpop.permute.xlu0 %226
    %228 = vrot.lane.b32.xlu0 %v169, 118
    %v229 = vpop.permute.xlu0 %228
    %v230 = vsel %vm120, %v227, %v229
    %231 = vst [vmem:[#allocation2 + $0x1a] sm:$0x1] %v230
    %232 = vrot.lane.b32.xlu0 %v165, 117
    %v233 = vpop.permute.xlu0 %232
    %234 = vrot.lane.b32.xlu0 %v169, 117
    %v235 = vpop.permute.xlu0 %234
    %v236 = vsel %vm127, %v233, %v235
    %237 = vst [vmem:[#allocation2 + $0x1b] sm:$0x1] %v236
    %238 = vrot.lane.b32.xlu0 %v165, 116
    %v239 = vpop.permute.xlu0 %238
    %240 = vrot.lane.b32.xlu0 %v169, 116
    %v241 = vpop.permute.xlu0 %240
    %v242 = vsel %vm134, %v239, %v241
    %243 = vst [vmem:[#allocation2 + $0x1c] sm:$0x1] %v242
    %244 = vrot.lane.b32.xlu0 %v165, 115
    %v245 = vpop.permute.xlu0 %244
    %246 = vrot.lane.b32.xlu0 %v169, 115
    %v247 = vpop.permute.xlu0 %246
    %v248 = vsel %vm141, %v245, %v247
    %249 = vst [vmem:[#allocation2 + $0x1d] sm:$0x1] %v248
    %250 = vrot.lane.b32.xlu0 %v165, 114
    %v251 = vpop.permute.xlu0 %250
    %252 = vrot.lane.b32.xlu0 %v169, 114
    %v253 = vpop.permute.xlu0 %252
    %v254 = vsel %vm148, %v251, %v253
    %255 = vst [vmem:[#allocation2 + $0x1e] sm:$0x1] %v254
    %256 = vrot.lane.b32.xlu0 %v165, 113
    %v257 = vpop.permute.xlu0 %256
    %258 = vrot.lane.b32.xlu0 %v169, 113
    %v259 = vpop.permute.xlu0 %258
    %v260 = vsel %vm155, %v257, %v259
    %261 = vst [vmem:[#allocation2 + $0x1f] sm:$0x1] %v260
    %v262 = vld [vmem:[#allocation6] sm:$0xff]
    %v263 = vld [vmem:[#allocation2] sm:$0xff]
    %v264 = vld [vmem:[#allocation2 + $0x8] sm:$0xff]
    %v265 = vld [vmem:[#allocation2 + $0x10] sm:$0xff]
    %v266 = vld [vmem:[#allocation2 + $0x18] sm:$0xff]
    %vm267 = vcmask 130048
    %v269 = vsel %vm267, %v262, 0
    %v271 = vand.u32 %v264, 4294901760
    %272 = vmatprep.subr.mxu0 %v271
    %v273 = vand.u32 %v263, 4294901760
    %274 = vmatpush1.msra.mxu0 %v273
    %v275 = vand.u32 %v266, 4294901760
    %276 = vmatprep.subr.mxu0 %v275
    %v277 = vand.u32 %v265, 4294901760
    %278 = vmatpush1.msra.mxu0 %v277
    %279 = vmatprep.subr.mxu0 0.0
    %280 = vmatpush1.msra.mxu0 0.0
    %281 = vmatprep.subr.mxu0 0.0
    %282 = vmatpush1.msra.mxu0 0.0
    %283 = vmatprep.subr.mxu0 0.0
    %284 = vmatpush1.msra.mxu0 0.0
    %285 = vmatprep.subr.mxu0 0.0
    %286 = vmatpush1.msra.mxu0 0.0
    %287 = vmatprep.subr.mxu0 0.0
    %288 = vmatpush1.msra.mxu0 0.0
    %289 = vmatprep.subr.mxu0 0.0
    %290 = vmatpush1.msra.mxu0 0.0
    %291 = vmatprep.subr.mxu0 0.0
    %292 = vmatpush1.msra.mxu0 0.0
    %293 = vmatprep.subr.mxu0 0.0
    %294 = vmatpush1.msra.mxu0 0.0
    %295 = vmatprep.subr.mxu0 0.0
    %296 = vmatpush1.msra.mxu0 0.0
    %297 = vmatprep.subr.mxu0 0.0
    %298 = vmatpush1.msra.mxu0 0.0
    %299 = vmatprep.subr.mxu0 0.0
    %300 = vmatpush1.msra.mxu0 0.0
    %301 = vmatprep.subr.mxu0 0.0
    %302 = vmatpush1.msra.mxu0 0.0
    %303 = vmatprep.subr.mxu0 0.0
    %304 = vmatpush1.msra.mxu0 0.0
    %305 = vmatprep.subr.mxu0 0.0
    %306 = vmatpush1.msra.mxu0 0.0
    %307 = vmatprep.subr.mxu0 0.0
    %308 = vmatpush1.msra.mxu0 0.0
    %309 = vmatprep.subr.mxu0 0.0
    %310 = vmatpush1.msra.mxu0 0.0
    %311 = vmatprep.subr.mxu0 0.0
    %312 = vmatpush1.msra.mxu0 0.0
    %313 = vmatprep.subr.mxu0 0.0
    %314 = vmatpush1.msra.mxu0 0.0
    %315 = vmatprep.subr.mxu0 0.0
    %316 = vmatpush1.msra.mxu0 0.0
    %317 = vmatprep.subr.mxu0 0.0
    %318 = vmatpush1.msra.mxu0 0.0
    %319 = vmatprep.subr.mxu0 0.0
    %320 = vmatpush1.msra.mxu0 0.0
    %321 = vmatprep.subr.mxu0 0.0
    %322 = vmatpush1.msra.mxu0 0.0
    %323 = vmatprep.subr.mxu0 0.0
    %324 = vmatpush1.msra.mxu0 0.0
    %325 = vmatprep.subr.mxu0 0.0
    %326 = vmatpush1.msra.mxu0 0.0
    %327 = vmatprep.subr.mxu0 0.0
    %328 = vmatpush1.msra.mxu0 0.0
    %329 = vmatprep.subr.mxu0 0.0
    %330 = vmatpush1.msra.mxu0 0.0
    %331 = vmatprep.subr.mxu0 0.0
    %332 = vmatpush1.msra.mxu0 0.0
    %333 = vmatprep.subr.mxu0 0.0
    %334 = vmatpush1.msra.mxu0 0.0
    %335 = vmatprep.subr.mxu0 0.0
    %336 = vmatpush1.msra.mxu0 0.0
    %337 = vmatprep.subr.mxu0 0.0
    %338 = vmatpush1.msra.mxu0 0.0
    %339 = vmatprep.mubr.f32.mxu0 0.0
    %v340 = vand.u32 %v269, 4294901760
    %v341 = vsub.f32 %v269, %v340
    %v342 = vand.u32 %v341, 4294901760
    %v343 = vsub.f32 %v341, %v342
    %v344 = vand.u32 %v343, 4294901760
    %345 = vmatmul.mubr.f32.gmra.mrb[0].mxu0 %v344
    %v346 = vpop.f32.mrb[0].mxu0
    %v347 = vadd.f32 0.0, %v346
    %v348 = vpop.f32.mrb[0].mxu0
    %v349 = vadd.f32 0.0, %v348
    %350 = vdwg.mxu0
    %v351 = vand.u32 %v264, 4294901760
    %v352 = vsub.f32 %v264, %v351
    %v353 = vand.u32 %v352, 4294901760
    %v354 = vsub.f32 %v352, %v353
    %v355 = vand.u32 %v354, 4294901760
    %356 = vmatprep.subr.mxu0 %v355
    %v357 = vand.u32 %v263, 4294901760
    %v358 = vsub.f32 %v263, %v357
    %v359 = vand.u32 %v358, 4294901760
    %v360 = vsub.f32 %v358, %v359
    %v361 = vand.u32 %v360, 4294901760
    %362 = vmatpush1.msra.mxu0 %v361
    %v363 = vand.u32 %v266, 4294901760
    %v364 = vsub.f32 %v266, %v363
    %v365 = vand.u32 %v364, 4294901760
    %v366 = vsub.f32 %v364, %v365
    %v367 = vand.u32 %v366, 4294901760
    %368 = vmatprep.subr.mxu0 %v367
    %v369 = vand.u32 %v265, 4294901760
    %v370 = vsub.f32 %v265, %v369
    %v371 = vand.u32 %v370, 4294901760
    %v372 = vsub.f32 %v370, %v371
    %v373 = vand.u32 %v372, 4294901760
    %374 = vmatpush1.msra.mxu0 %v373
    %375 = vmatprep.subr.mxu0 0.0
    %376 = vmatpush1.msra.mxu0 0.0
    %377 = vmatprep.subr.mxu0 0.0
    %378 = vmatpush1.msra.mxu0 0.0
    %379 = vmatprep.subr.mxu0 0.0
    %380 = vmatpush1.msra.mxu0 0.0
    %381 = vmatprep.subr.mxu0 0.0
    %382 = vmatpush1.msra.mxu0 0.0
    %383 = vmatprep.subr.mxu0 0.0
    %384 = vmatpush1.msra.mxu0 0.0
    %385 = vmatprep.subr.mxu0 0.0
    %386 = vmatpush1.msra.mxu0 0.0
    %387 = vmatprep.subr.mxu0 0.0
    %388 = vmatpush1.msra.mxu0 0.0
    %389 = vmatprep.subr.mxu0 0.0
    %390 = vmatpush1.msra.mxu0 0.0
    %391 = vmatprep.subr.mxu0 0.0
    %392 = vmatpush1.msra.mxu0 0.0
    %393 = vmatprep.subr.mxu0 0.0
    %394 = vmatpush1.msra.mxu0 0.0
    %395 = vmatprep.subr.mxu0 0.0
    %396 = vmatpush1.msra.mxu0 0.0
    %397 = vmatprep.subr.mxu0 0.0
    %398 = vmatpush1.msra.mxu0 0.0
    %399 = vmatprep.subr.mxu0 0.0
    %400 = vmatpush1.msra.mxu0 0.0
    %401 = vmatprep.subr.mxu0 0.0
    %402 = vmatpush1.msra.mxu0 0.0
    %403 = vmatprep.subr.mxu0 0.0
    %404 = vmatpush1.msra.mxu0 0.0
    %405 = vmatprep.subr.mxu0 0.0
    %406 = vmatpush1.msra.mxu0 0.0
    %407 = vmatprep.subr.mxu0 0.0
    %408 = vmatpush1.msra.mxu0 0.0
    %409 = vmatprep.subr.mxu0 0.0
    %410 = vmatpush1.msra.mxu0 0.0
    %411 = vmatprep.subr.mxu0 0.0
    %412 = vmatpush1.msra.mxu0 0.0
    %413 = vmatprep.subr.mxu0 0.0
    %414 = vmatpush1.msra.mxu0 0.0
    %415 = vmatprep.subr.mxu0 0.0
    %416 = vmatpush1.msra.mxu0 0.0
    %417 = vmatprep.subr.mxu0 0.0
    %418 = vmatpush1.msra.mxu0 0.0
    %419 = vmatprep.subr.mxu0 0.0
    %420 = vmatpush1.msra.mxu0 0.0
    %421 = vmatprep.subr.mxu0 0.0
    %422 = vmatpush1.msra.mxu0 0.0
    %423 = vmatprep.subr.mxu0 0.0
    %424 = vmatpush1.msra.mxu0 0.0
    %425 = vmatprep.subr.mxu0 0.0
    %426 = vmatpush1.msra.mxu0 0.0
    %427 = vmatprep.subr.mxu0 0.0
    %428 = vmatpush1.msra.mxu0 0.0
    %429 = vmatprep.subr.mxu0 0.0
    %430 = vmatpush1.msra.mxu0 0.0
    %431 = vmatprep.subr.mxu0 0.0
    %432 = vmatpush1.msra.mxu0 0.0
    %433 = vmatprep.subr.mxu0 0.0
    %434 = vmatpush1.msra.mxu0 0.0
    %435 = vmatprep.mubr.f32.mxu0 0.0
    %v436 = vand.u32 %v269, 4294901760
    %437 = vmatmul.mubr.f32.gmra.mrb[0].mxu0 %v436
    %v438 = vpop.f32.mrb[0].mxu0
    %v439 = vadd.f32 %v347, %v438
    %v440 = vpop.f32.mrb[0].mxu0
    %v441 = vadd.f32 %v349, %v440
    %442 = vdwg.mxu0
    %v443 = vand.u32 %v264, 4294901760
    %v444 = vsub.f32 %v264, %v443
    %445 = vmatprep.subr.mxu0 %v444
    %v446 = vand.u32 %v263, 4294901760
    %v447 = vsub.f32 %v263, %v446
    %448 = vmatpush1.msra.mxu0 %v447
    %v449 = vand.u32 %v266, 4294901760
    %v450 = vsub.f32 %v266, %v449
    %451 = vmatprep.subr.mxu0 %v450
    %v452 = vand.u32 %v265, 4294901760
    %v453 = vsub.f32 %v265, %v452
    %454 = vmatpush1.msra.mxu0 %v453
    %455 = vmatprep.subr.mxu0 0.0
    %456 = vmatpush1.msra.mxu0 0.0
    %457 = vmatprep.subr.mxu0 0.0
    %458 = vmatpush1.msra.mxu0 0.0
    %459 = vmatprep.subr.mxu0 0.0
    %460 = vmatpush1.msra.mxu0 0.0
    %461 = vmatprep.subr.mxu0 0.0
    %462 = vmatpush1.msra.mxu0 0.0
    %463 = vmatprep.subr.mxu0 0.0
    %464 = vmatpush1.msra.mxu0 0.0
    %465 = vmatprep.subr.mxu0 0.0
    %466 = vmatpush1.msra.mxu0 0.0
    %467 = vmatprep.subr.mxu0 0.0
    %468 = vmatpush1.msra.mxu0 0.0
    %469 = vmatprep.subr.mxu0 0.0
    %470 = vmatpush1.msra.mxu0 0.0
    %471 = vmatprep.subr.mxu0 0.0
    %472 = vmatpush1.msra.mxu0 0.0
    %473 = vmatprep.subr.mxu0 0.0
    %474 = vmatpush1.msra.mxu0 0.0
    %475 = vmatprep.subr.mxu0 0.0
    %476 = vmatpush1.msra.mxu0 0.0
    %477 = vmatprep.subr.mxu0 0.0
    %478 = vmatpush1.msra.mxu0 0.0
    %479 = vmatprep.subr.mxu0 0.0
    %480 = vmatpush1.msra.mxu0 0.0
    %481 = vmatprep.subr.mxu0 0.0
    %482 = vmatpush1.msra.mxu0 0.0
    %483 = vmatprep.subr.mxu0 0.0
    %484 = vmatpush1.msra.mxu0 0.0
    %485 = vmatprep.subr.mxu0 0.0
    %486 = vmatpush1.msra.mxu0 0.0
    %487 = vmatprep.subr.mxu0 0.0
    %488 = vmatpush1.msra.mxu0 0.0
    %489 = vmatprep.subr.mxu0 0.0
    %490 = vmatpush1.msra.mxu0 0.0
    %491 = vmatprep.subr.mxu0 0.0
    %492 = vmatpush1.msra.mxu0 0.0
    %493 = vmatprep.subr.mxu0 0.0
    %494 = vmatpush1.msra.mxu0 0.0
    %495 = vmatprep.subr.mxu0 0.0
    %496 = vmatpush1.msra.mxu0 0.0
    %497 = vmatprep.subr.mxu0 0.0
    %498 = vmatpush1.msra.mxu0 0.0
    %499 = vmatprep.subr.mxu0 0.0
    %500 = vmatpush1.msra.mxu0 0.0
    %501 = vmatprep.subr.mxu0 0.0
    %502 = vmatpush1.msra.mxu0 0.0
    %503 = vmatprep.subr.mxu0 0.0
    %504 = vmatpush1.msra.mxu0 0.0
    %505 = vmatprep.subr.mxu0 0.0
    %506 = vmatpush1.msra.mxu0 0.0
    %507 = vmatprep.subr.mxu0 0.0
    %508 = vmatpush1.msra.mxu0 0.0
    %509 = vmatprep.subr.mxu0 0.0
    %510 = vmatpush1.msra.mxu0 0.0
    %511 = vmatprep.subr.mxu0 0.0
    %512 = vmatpush1.msra.mxu0 0.0
    %513 = vmatprep.subr.mxu0 0.0
    %514 = vmatpush1.msra.mxu0 0.0
    %515 = vmatprep.mubr.f32.mxu0 0.0
    %v516 = vand.u32 %v269, 4294901760
    %v517 = vsub.f32 %v269, %v516
    %518 = vmatmul.mubr.f32.gmra.mrb[0].mxu0 %v517
    %v519 = vpop.f32.mrb[0].mxu0
    %v520 = vadd.f32 %v439, %v519
    %v521 = vpop.f32.mrb[0].mxu0
    %v522 = vadd.f32 %v441, %v521
    %523 = vdwg.mxu0
    %v524 = vand.u32 %v264, 4294901760
    %525 = vmatprep.subr.mxu0 %v524
    %v526 = vand.u32 %v263, 4294901760
    %527 = vmatpush1.msra.mxu0 %v526
    %v528 = vand.u32 %v266, 4294901760
    %529 = vmatprep.subr.mxu0 %v528
    %v530 = vand.u32 %v265, 4294901760
    %531 = vmatpush1.msra.mxu0 %v530
    %532 = vmatprep.subr.mxu0 0.0
    %533 = vmatpush1.msra.mxu0 0.0
    %534 = vmatprep.subr.mxu0 0.0
    %535 = vmatpush1.msra.mxu0 0.0
    %536 = vmatprep.subr.mxu0 0.0
    %537 = vmatpush1.msra.mxu0 0.0
    %538 = vmatprep.subr.mxu0 0.0
    %539 = vmatpush1.msra.mxu0 0.0
    %540 = vmatprep.subr.mxu0 0.0
    %541 = vmatpush1.msra.mxu0 0.0
    %542 = vmatprep.subr.mxu0 0.0
    %543 = vmatpush1.msra.mxu0 0.0
    %544 = vmatprep.subr.mxu0 0.0
    %545 = vmatpush1.msra.mxu0 0.0
    %546 = vmatprep.subr.mxu0 0.0
    %547 = vmatpush1.msra.mxu0 0.0
    %548 = vmatprep.subr.mxu0 0.0
    %549 = vmatpush1.msra.mxu0 0.0
    %550 = vmatprep.subr.mxu0 0.0
    %551 = vmatpush1.msra.mxu0 0.0
    %552 = vmatprep.subr.mxu0 0.0
    %553 = vmatpush1.msra.mxu0 0.0
    %554 = vmatprep.subr.mxu0 0.0
    %555 = vmatpush1.msra.mxu0 0.0
    %556 = vmatprep.subr.mxu0 0.0
    %557 = vmatpush1.msra.mxu0 0.0
    %558 = vmatprep.subr.mxu0 0.0
    %559 = vmatpush1.msra.mxu0 0.0
    %560 = vmatprep.subr.mxu0 0.0
    %561 = vmatpush1.msra.mxu0 0.0
    %562 = vmatprep.subr.mxu0 0.0
    %563 = vmatpush1.msra.mxu0 0.0
    %564 = vmatprep.subr.mxu0 0.0
    %565 = vmatpush1.msra.mxu0 0.0
    %566 = vmatprep.subr.mxu0 0.0
    %567 = vmatpush1.msra.mxu0 0.0
    %568 = vmatprep.subr.mxu0 0.0
    %569 = vmatpush1.msra.mxu0 0.0
    %570 = vmatprep.subr.mxu0 0.0
    %571 = vmatpush1.msra.mxu0 0.0
    %572 = vmatprep.subr.mxu0 0.0
    %573 = vmatpush1.msra.mxu0 0.0
    %574 = vmatprep.subr.mxu0 0.0
    %575 = vmatpush1.msra.mxu0 0.0
    %576 = vmatprep.subr.mxu0 0.0
    %577 = vmatpush1.msra.mxu0 0.0
    %578 = vmatprep.subr.mxu0 0.0
    %579 = vmatpush1.msra.mxu0 0.0
    %580 = vmatprep.subr.mxu0 0.0
    %581 = vmatpush1.msra.mxu0 0.0
    %582 = vmatprep.subr.mxu0 0.0
    %583 = vmatpush1.msra.mxu0 0.0
    %584 = vmatprep.subr.mxu0 0.0
    %585 = vmatpush1.msra.mxu0 0.0
    %586 = vmatprep.subr.mxu0 0.0
    %587 = vmatpush1.msra.mxu0 0.0
    %588 = vmatprep.subr.mxu0 0.0
    %589 = vmatpush1.msra.mxu0 0.0
    %590 = vmatprep.subr.mxu0 0.0
    %591 = vmatpush1.msra.mxu0 0.0
    %592 = vmatprep.mubr.f32.mxu0 0.0
    %v593 = vand.u32 %v269, 4294901760
    %v594 = vsub.f32 %v269, %v593
    %v595 = vand.u32 %v594, 4294901760
    %596 = vmatmul.mubr.f32.gmra.mrb[0].mxu0 %v595
    %v597 = vpop.f32.mrb[0].mxu0
    %v598 = vadd.f32 %v520, %v597
    %v599 = vpop.f32.mrb[0].mxu0
    %v600 = vadd.f32 %v522, %v599
    %601 = vdwg.mxu0
    %v602 = vand.u32 %v264, 4294901760
    %v603 = vsub.f32 %v264, %v602
    %v604 = vand.u32 %v603, 4294901760
    %605 = vmatprep.subr.mxu0 %v604
    %v606 = vand.u32 %v263, 4294901760
    %v607 = vsub.f32 %v263, %v606
    %v608 = vand.u32 %v607, 4294901760
    %609 = vmatpush1.msra.mxu0 %v608
    %v610 = vand.u32 %v266, 4294901760
    %v611 = vsub.f32 %v266, %v610
    %v612 = vand.u32 %v611, 4294901760
    %613 = vmatprep.subr.mxu0 %v612
    %v614 = vand.u32 %v265, 4294901760
    %v615 = vsub.f32 %v265, %v614
    %v616 = vand.u32 %v615, 4294901760
    %617 = vmatpush1.msra.mxu0 %v616
    %618 = vmatprep.subr.mxu0 0.0
    %619 = vmatpush1.msra.mxu0 0.0
    %620 = vmatprep.subr.mxu0 0.0
    %621 = vmatpush1.msra.mxu0 0.0
    %622 = vmatprep.subr.mxu0 0.0
    %623 = vmatpush1.msra.mxu0 0.0
    %624 = vmatprep.subr.mxu0 0.0
    %625 = vmatpush1.msra.mxu0 0.0
    %626 = vmatprep.subr.mxu0 0.0
    %627 = vmatpush1.msra.mxu0 0.0
    %628 = vmatprep.subr.mxu0 0.0
    %629 = vmatpush1.msra.mxu0 0.0
    %630 = vmatprep.subr.mxu0 0.0
    %631 = vmatpush1.msra.mxu0 0.0
    %632 = vmatprep.subr.mxu0 0.0
    %633 = vmatpush1.msra.mxu0 0.0
    %634 = vmatprep.subr.mxu0 0.0
    %635 = vmatpush1.msra.mxu0 0.0
    %636 = vmatprep.subr.mxu0 0.0
    %637 = vmatpush1.msra.mxu0 0.0
    %638 = vmatprep.subr.mxu0 0.0
    %639 = vmatpush1.msra.mxu0 0.0
    %640 = vmatprep.subr.mxu0 0.0
    %641 = vmatpush1.msra.mxu0 0.0
    %642 = vmatprep.subr.mxu0 0.0
    %643 = vmatpush1.msra.mxu0 0.0
    %644 = vmatprep.subr.mxu0 0.0
    %645 = vmatpush1.msra.mxu0 0.0
    %646 = vmatprep.subr.mxu0 0.0
    %647 = vmatpush1.msra.mxu0 0.0
    %648 = vmatprep.subr.mxu0 0.0
    %649 = vmatpush1.msra.mxu0 0.0
    %650 = vmatprep.subr.mxu0 0.0
    %651 = vmatpush1.msra.mxu0 0.0
    %652 = vmatprep.subr.mxu0 0.0
    %653 = vmatpush1.msra.mxu0 0.0
    %654 = vmatprep.subr.mxu0 0.0
    %655 = vmatpush1.msra.mxu0 0.0
    %656 = vmatprep.subr.mxu0 0.0
    %657 = vmatpush1.msra.mxu0 0.0
    %658 = vmatprep.subr.mxu0 0.0
    %659 = vmatpush1.msra.mxu0 0.0
    %660 = vmatprep.subr.mxu0 0.0
    %661 = vmatpush1.msra.mxu0 0.0
    %662 = vmatprep.subr.mxu0 0.0
    %663 = vmatpush1.msra.mxu0 0.0
    %664 = vmatprep.subr.mxu0 0.0
    %665 = vmatpush1.msra.mxu0 0.0
    %666 = vmatprep.subr.mxu0 0.0
    %667 = vmatpush1.msra.mxu0 0.0
    %668 = vmatprep.subr.mxu0 0.0
    %669 = vmatpush1.msra.mxu0 0.0
    %670 = vmatprep.subr.mxu0 0.0
    %671 = vmatpush1.msra.mxu0 0.0
    %672 = vmatprep.subr.mxu0 0.0
    %673 = vmatpush1.msra.mxu0 0.0
    %674 = vmatprep.subr.mxu0 0.0
    %675 = vmatpush1.msra.mxu0 0.0
    %676 = vmatprep.subr.mxu0 0.0
    %677 = vmatpush1.msra.mxu0 0.0
    %678 = vmatprep.mubr.f32.mxu0 0.0
    %v679 = vand.u32 %v269, 4294901760
    %680 = vmatmul.mubr.f32.gmra.mrb[0].mxu0 %v679
    %v681 = vpop.f32.mrb[0].mxu0
    %v682 = vadd.f32 %v598, %v681
    %v683 = vpop.f32.mrb[0].mxu0
    %v684 = vadd.f32 %v600, %v683
    %685 = vdwg.mxu0
    %v686 = vand.u32 %v264, 4294901760
    %687 = vmatprep.subr.mxu0 %v686
    %v688 = vand.u32 %v263, 4294901760
    %689 = vmatpush1.msra.mxu0 %v688
    %v690 = vand.u32 %v266, 4294901760
    %691 = vmatprep.subr.mxu0 %v690
    %v692 = vand.u32 %v265, 4294901760
    %693 = vmatpush1.msra.mxu0 %v692
    %694 = vmatprep.subr.mxu0 0.0
    %695 = vmatpush1.msra.mxu0 0.0
    %696 = vmatprep.subr.mxu0 0.0
    %697 = vmatpush1.msra.mxu0 0.0
    %698 = vmatprep.subr.mxu0 0.0
    %699 = vmatpush1.msra.mxu0 0.0
    %700 = vmatprep.subr.mxu0 0.0
    %701 = vmatpush1.msra.mxu0 0.0
    %702 = vmatprep.subr.mxu0 0.0
    %703 = vmatpush1.msra.mxu0 0.0
    %704 = vmatprep.subr.mxu0 0.0
    %705 = vmatpush1.msra.mxu0 0.0
    %706 = vmatprep.subr.mxu0 0.0
    %707 = vmatpush1.msra.mxu0 0.0
    %708 = vmatprep.subr.mxu0 0.0
    %709 = vmatpush1.msra.mxu0 0.0
    %710 = vmatprep.subr.mxu0 0.0
    %711 = vmatpush1.msra.mxu0 0.0
    %712 = vmatprep.subr.mxu0 0.0
    %713 = vmatpush1.msra.mxu0 0.0
    %714 = vmatprep.subr.mxu0 0.0
    %715 = vmatpush1.msra.mxu0 0.0
    %716 = vmatprep.subr.mxu0 0.0
    %717 = vmatpush1.msra.mxu0 0.0
    %718 = vmatprep.subr.mxu0 0.0
    %719 = vmatpush1.msra.mxu0 0.0
    %720 = vmatprep.subr.mxu0 0.0
    %721 = vmatpush1.msra.mxu0 0.0
    %722 = vmatprep.subr.mxu0 0.0
    %723 = vmatpush1.msra.mxu0 0.0
    %724 = vmatprep.subr.mxu0 0.0
    %725 = vmatpush1.msra.mxu0 0.0
    %726 = vmatprep.subr.mxu0 0.0
    %727 = vmatpush1.msra.mxu0 0.0
    %728 = vmatprep.subr.mxu0 0.0
    %729 = vmatpush1.msra.mxu0 0.0
    %730 = vmatprep.subr.mxu0 0.0
    %731 = vmatpush1.msra.mxu0 0.0
    %732 = vmatprep.subr.mxu0 0.0
    %733 = vmatpush1.msra.mxu0 0.0
    %734 = vmatprep.subr.mxu0 0.0
    %735 = vmatpush1.msra.mxu0 0.0
    %736 = vmatprep.subr.mxu0 0.0
    %737 = vmatpush1.msra.mxu0 0.0
    %738 = vmatprep.subr.mxu0 0.0
    %739 = vmatpush1.msra.mxu0 0.0
    %740 = vmatprep.subr.mxu0 0.0
    %741 = vmatpush1.msra.mxu0 0.0
    %742 = vmatprep.subr.mxu0 0.0
    %743 = vmatpush1.msra.mxu0 0.0
    %744 = vmatprep.subr.mxu0 0.0
    %745 = vmatpush1.msra.mxu0 0.0
    %746 = vmatprep.subr.mxu0 0.0
    %747 = vmatpush1.msra.mxu0 0.0
    %748 = vmatprep.subr.mxu0 0.0
    %749 = vmatpush1.msra.mxu0 0.0
    %750 = vmatprep.subr.mxu0 0.0
    %751 = vmatpush1.msra.mxu0 0.0
    %752 = vmatprep.subr.mxu0 0.0
    %753 = vmatpush1.msra.mxu0 0.0
    %754 = vmatprep.mubr.f32.mxu0 0.0
    %v755 = vand.u32 %v269, 4294901760
    %756 = vmatmul.mubr.f32.gmra.mrb[0].mxu0 %v755
    %v757 = vpop.f32.mrb[0].mxu0
    %v758 = vadd.f32 %v682, %v757
    %v759 = vpop.f32.mrb[0].mxu0
    %v760 = vadd.f32 %v684, %v759
    %761 = vdwg.mxu0
    %762 = vst [vmem:[#allocation8] sm:$0xff] %v758
    %s763 = scalar_lea.vmem [#allocation8], 8
    %764 = vst [vmem:[%s763] sm:$0xff] %v760
    // Predicated region
    $region18: #{tpu_custom_call.1} parent=1 // pred_check
      _
    $region19: #{tpu_custom_call.1} parent=1 // pred_check_branch
      %766 = sbr.rel (0) target = $region21
    $region20: #{tpu_custom_call.1} parent=1 // pred_region
      %s768 = ssub.s32 256, 256
      %769 = vsyncadd [#allocation5], %s768
      %s770 = sshll.u32 [#allocation8], 4
      %s771 = int_to_ptr.vmem [resolvable:$true] %s770
      %776 = dma.vmem_to_hbm [thread:$0]  %s771, 256, %s2, [#allocation5], 128, 128, 8
    $region21: #{tpu_custom_call.1} parent=1 // pred_fallthru
      _
    // Predicated region
    $region22: #{tpu_custom_call.1} parent=1 // pred_check
      _
    $region23: #{tpu_custom_call.1} parent=1 // pred_check_branch
      %778 = sbr.rel (0) target = $region25
    $region24: #{tpu_custom_call.1} parent=1 // pred_region
      %779 = dma.done [#allocation5], 256
    $region25: #{tpu_custom_call.1} parent=1 // pred_fallthru
      _
    %780 = vsyncpa [#allocation4], 1
    %781 = vsyncpa [#allocation7], 1
    %782 = vsyncpa [#allocation5], 1

</llo_original>
